<compile_context>
chip_gen: v6e
topology: v6e:2x2x1
jax: 0.10.0
libtpu: 0.0.40
codegen_flags: <defaults>
</compile_context>

<pallas_src>
import jax
import jax.numpy as jnp
from jax.experimental import pallas as pl
from jax.experimental.pallas import tpu as pltpu

_LANE = 128


def _round_up(v, m):
    return ((v + m - 1) // m) * m


def _sublane(dtype):
    # f32 -> 8 sublanes, bf16 -> 16, int8/fp8 -> 32 (sub-32-bit packs sublanes)
    itemsize = jnp.dtype(dtype).itemsize
    return 8 * max(1, 4 // itemsize)


def _vmem_limit(footprint_bytes):
    # Footprint + headroom for compiler-internal scratch; keep under physical.
    return int(min(max(footprint_bytes + (8 << 20), 16 << 20), 96 << 20))


# ---------------- Path B: spatial tiling (large S) ----------------
def _pointwise_conv_kernel(x_ref, w_ref, b_ref, o_ref):
    # x_ref: (C_in, ts)   w_ref: (C_out, C_in)   b_ref: (C_out, 1)
    # o_ref: (C_out, ts)  -- spatial (lane-dense) on the last axis.
    acc = jnp.dot(w_ref[...], x_ref[...], preferred_element_type=jnp.float32)
    o_ref[...] = (acc + b_ref[...]).astype(o_ref.dtype)


# ---------------- Path A: batch packing (small S) ----------------
def _make_batched_kernel(nb):
    def kernel(x_ref, w_ref, b_ref, o_ref):
        # x_ref: (nb, C_in, S)   o_ref: (nb, C_out, S)
        w = w_ref[...]
        b = b_ref[...]
        for n in range(nb):        # static unroll, nb <= 16
            acc = jnp.dot(w, x_ref[n], preferred_element_type=jnp.float32) + b
            o_ref[n] = acc.astype(o_ref.dtype)
    return kernel


def out_conv(x, weight, bias, *,
             desired_block_spatial=262144,
             vmem_budget=32 * 1024 * 1024,
             small_spatial_threshold=32768,
             max_batch_per_block=16):
    """1x1x1 Conv3d forward.

    x:      (N, C_in, D, H, W)     float32
    weight: (C_out, C_in, 1, 1, 1) float32 (PyTorch layout)
    bias:   (C_out,)               float32
    returns (N, C_out, D, H, W)    float32
    """
    N, C_in, D, H, W = x.shape
    C_out = weight.shape[0]
    S = D * H * W
    dtype = x.dtype
    itemsize = jnp.dtype(dtype).itemsize
    sub = _sublane(dtype)
    pc_in = _round_up(C_in, sub)
    pc_out = _round_up(C_out, sub)

    # Free reshapes only -- no HBM transposes.
    x2 = x.reshape(N, C_in, S)
    w2 = weight.reshape(C_out, C_in)
    b2 = bias.reshape(C_out, 1)

    # Resident weight + bias blocks (lane/sublane padded, double-buffered).
    static_bytes = 2 * (pc_out * _round_up(C_in, _LANE) + pc_out * _LANE) * itemsize
    budget = max(vmem_budget - static_bytes, 1 << 20)
    # Padding-aware per-spatial-column cost of double-buffered x + out blocks.
    per_col = 2 * (pc_in + pc_out) * itemsize

    if S <= small_spatial_threshold:
        # -------- Path A: full spatial extent, pack batch elements per step.
        s_pad = _round_up(S, _LANE)
        per_batch = per_col * s_pad
        nb = int(max(1, min(N, max_batch_per_block, budget // per_batch)))
        grid = (pl.cdiv(N, nb),)
        footprint = static_bytes + per_batch * nb

        y2 = pl.pallas_call(
            _make_batched_kernel(nb),
            out_shape=jax.ShapeDtypeStruct((N, C_out, S), dtype),
            grid_spec=pltpu.PrefetchScalarGridSpec(
                num_scalar_prefetch=0,
                grid=grid,
                in_specs=[
                    pl.BlockSpec((nb, C_in, S), lambda g: (g, 0, 0)),
                    pl.BlockSpec((C_out, C_in), lambda g: (0, 0)),
                    pl.BlockSpec((C_out, 1), lambda g: (0, 0)),
                ],
                out_specs=pl.BlockSpec((nb, C_out, S), lambda g: (g, 0, 0)),
            ),
            compiler_params=pltpu.CompilerParams(
                dimension_semantics=("parallel",),
                vmem_limit_bytes=_vmem_limit(footprint),
            ),
        )(x2, w2, b2)
    else:
        # -------- Path B: tile the spatial axis; flat 1-D grid over (n, tile).
        cap = max(_LANE, (budget // per_col) // _LANE * _LANE)
        ts = min(desired_block_spatial, cap)
        if S <= ts:
            ts = S                              # full extent block: always legal
        else:
            ts = max(_LANE, (ts // _LANE) * _LANE)   # 128-multiple lane dim
        n_tiles = int(pl.cdiv(S, ts))
        grid = (N * n_tiles,)                   # single parallel axis -> even
        footprint = static_bytes + per_col * ts  # megacore split on v7x

        y2 = pl.pallas_call(
            _pointwise_conv_kernel,
            out_shape=jax.ShapeDtypeStruct((N, C_out, S), dtype),
            grid_spec=pltpu.PrefetchScalarGridSpec(
                num_scalar_prefetch=0,
                grid=grid,
                in_specs=[
                    pl.BlockSpec((None, C_in, ts),
                                 lambda g, nt=n_tiles: (g // nt, 0, g % nt)),
                    pl.BlockSpec((C_out, C_in), lambda g: (0, 0)),
                    pl.BlockSpec((C_out, 1), lambda g: (0, 0)),
                ],
                out_specs=pl.BlockSpec((None, C_out, ts),
                                       lambda g, nt=n_tiles: (g // nt, 0, g % nt)),
            ),
            compiler_params=pltpu.CompilerParams(
                dimension_semantics=("parallel",),
                vmem_limit_bytes=_vmem_limit(footprint),
            ),
        )(x2, w2, b2)

    return y2.reshape(N, C_out, D, H, W)


def _reference(x, weight, bias):
    C_out, C_in = weight.shape[0], weight.shape[1]
    return (jnp.einsum("ncdhw,oc->nodhw", x, weight.reshape(C_out, C_in))
            + bias[None, :, None, None, None])


if __name__ == "__main__":
    key = jax.random.PRNGKey(0)
    k_x, k_w, k_b, k_x2, k_x3 = jax.random.split(key, 5)

    N, C_in, C_out = 2, 4, 3
    weight = jax.random.normal(k_w, (C_out, C_in, 1, 1, 1), dtype=jnp.float32) * 0.1
    bias = jax.random.normal(k_b, (C_out,), dtype=jnp.float32) * 0.1

    # Test 1: small spatial extent -> batched Path A (Nb batch elems per step).
    x = jax.random.normal(k_x, (N, C_in, 4, 8, 8), dtype=jnp.float32)
    y = jax.block_until_ready(out_conv(x, weight, bias))
    ref = _reference(x, weight, bias)
    assert y.shape == (N, C_out, 4, 8, 8)
    assert jnp.allclose(y, ref, atol=1e-5, rtol=1e-5)

    # Test 2: odd spatial extent (not a multiple of 128), full-extent block.
    x_odd = jax.random.normal(k_x2, (N, C_in, 3, 5, 7), dtype=jnp.float32)
    y_odd = jax.block_until_ready(out_conv(x_odd, weight, bias))
    ref_odd = _reference(x_odd, weight, bias)
    assert y_odd.shape == (N, C_out, 3, 5, 7)
    assert jnp.allclose(y_odd, ref_odd, atol=1e-5, rtol=1e-5)

    # Test 3: force the spatial-tiling path (Path B) with a partial tail tile
    # and the flat (n, tile) grid.
    x_big = jax.random.normal(k_x3, (1, C_in, 4, 9, 37), dtype=jnp.float32)  # S=1332
    y_big = jax.block_until_ready(
        out_conv(x_big, weight, bias,
                 desired_block_spatial=256, small_spatial_threshold=0))
    ref_big = _reference(x_big, weight, bias)
    assert y_big.shape == (1, C_out, 4, 9, 37)
    assert jnp.allclose(y_big, ref_big, atol=1e-5, rtol=1e-5)

    print("KERNEL_OK")
</pallas_src>

<mosaic_0001>
module attributes {stable_mosaic.version = 11 : i64} {
  func.func @kernel(%arg0: i32, %arg1: memref<2x4x256xf32, #tpu.memory_space<vmem>>, %arg2: memref<3x4xf32, #tpu.memory_space<vmem>>, %arg3: memref<3x1xf32, #tpu.memory_space<vmem>>, %arg4: memref<2x3x256xf32, #tpu.memory_space<vmem>>) attributes {dimension_semantics = [#tpu.dimension_semantics<parallel>], iteration_bounds = array<i64: 1>, scalar_prefetch = 0 : i64, scratch_operands = 0 : i64, tpu.core_type = #tpu.core_type<tc>, window_params = [{transform_indices = @transform_0, window_bounds = array<i64: 2, 4, 256>}, {pipeline_mode = #tpu.pipeline_mode<synchronous>, transform_indices = @transform_1, window_bounds = array<i64: 3, 4>}, {pipeline_mode = #tpu.pipeline_mode<synchronous>, transform_indices = @transform_2, window_bounds = array<i64: 3, 1>}, {transform_indices = @transform_3, window_bounds = array<i64: 2, 3, 256>}]} {
    %c0 = arith.constant 0 : index
    %c0_0 = arith.constant 0 : index
    %0 = vector.load %arg2[%c0, %c0_0] : memref<3x4xf32, #tpu.memory_space<vmem>>, vector<3x4xf32>
    %c0_1 = arith.constant 0 : index
    %c0_2 = arith.constant 0 : index
    %1 = vector.load %arg3[%c0_1, %c0_2] : memref<3x1xf32, #tpu.memory_space<vmem>>, vector<3x1xf32>
    %c0_3 = arith.constant 0 : index
    %c0_4 = arith.constant 0 : index
    %c0_5 = arith.constant 0 : index
    %2 = vector.load %arg1[%c0_3, %c0_4, %c0_5] : memref<2x4x256xf32, #tpu.memory_space<vmem>>, vector<1x4x256xf32>
    %3 = vector.shape_cast %2 : vector<1x4x256xf32> to vector<4x256xf32>
    %cst = arith.constant dense<0.000000e+00> : vector<3x256xf32>
    %4 = tpu.matmul %0, %3, %cst {dimension_numbers = #tpu.dot_dimension_numbers<[1], [0], [0], [1], [0, 0, 1, 1], [], []>} : vector<3x4xf32>, vector<4x256xf32>, vector<3x256xf32> -> vector<3x256xf32>
    %5 = vector.broadcast %1 : vector<3x1xf32> to vector<3x256xf32>
    %6 = arith.addf %4, %5 : vector<3x256xf32>
    %c0_6 = arith.constant 0 : index
    %c0_7 = arith.constant 0 : index
    %c0_8 = arith.constant 0 : index
    %7 = vector.load %arg4[%c0_6, %c0_7, %c0_8] : memref<2x3x256xf32, #tpu.memory_space<vmem>>, vector<1x3x256xf32>
    %8 = vector.shape_cast %7 : vector<1x3x256xf32> to vector<3x256xf32>
    %9 = vector.shape_cast %6 : vector<3x256xf32> to vector<1x3x256xf32>
    tpu.vector_store %arg4[%c0_6, %c0_7, %c0_8], %9 {strides = array<i32>} : memref<2x3x256xf32, #tpu.memory_space<vmem>>, vector<1x3x256xf32>,
    %c1 = arith.constant 1 : index
    %c0_9 = arith.constant 0 : index
    %c0_10 = arith.constant 0 : index
    %10 = vector.load %arg1[%c1, %c0_9, %c0_10] : memref<2x4x256xf32, #tpu.memory_space<vmem>>, vector<1x4x256xf32>
    %11 = vector.shape_cast %10 : vector<1x4x256xf32> to vector<4x256xf32>
    %cst_11 = arith.constant dense<0.000000e+00> : vector<3x256xf32>
    %12 = tpu.matmul %0, %11, %cst_11 {dimension_numbers = #tpu.dot_dimension_numbers<[1], [0], [0], [1], [0, 0, 1, 1], [], []>} : vector<3x4xf32>, vector<4x256xf32>, vector<3x256xf32> -> vector<3x256xf32>
    %13 = vector.broadcast %1 : vector<3x1xf32> to vector<3x256xf32>
    %14 = arith.addf %12, %13 : vector<3x256xf32>
    %c1_12 = arith.constant 1 : index
    %c0_13 = arith.constant 0 : index
    %c0_14 = arith.constant 0 : index
    %15 = vector.load %arg4[%c1_12, %c0_13, %c0_14] : memref<2x3x256xf32, #tpu.memory_space<vmem>>, vector<1x3x256xf32>
    %16 = vector.shape_cast %15 : vector<1x3x256xf32> to vector<3x256xf32>
    %17 = vector.shape_cast %14 : vector<3x256xf32> to vector<1x3x256xf32>
    tpu.vector_store %arg4[%c1_12, %c0_13, %c0_14], %17 {strides = array<i32>} : memref<2x3x256xf32, #tpu.memory_space<vmem>>, vector<1x3x256xf32>,
    return
  }
  func.func @transform_0(%arg0: i32) -> (i32, i32, i32) {
    %c0_i32 = arith.constant 0 : i32
    %c0_i32_0 = arith.constant 0 : i32
    %c0_i32_1 = arith.constant 0 : i32
    return %arg0, %c0_i32, %c0_i32_0 : i32, i32, i32
  }
  func.func @transform_1(%arg0: i32) -> (i32, i32) {
    %c0_i32 = arith.constant 0 : i32
    %c0_i32_0 = arith.constant 0 : i32
    %c0_i32_1 = arith.constant 0 : i32
    return %c0_i32, %c0_i32_0 : i32, i32
  }
  func.func @transform_2(%arg0: i32) -> (i32, i32) {
    %c0_i32 = arith.constant 0 : i32
    %c0_i32_0 = arith.constant 0 : i32
    %c0_i32_1 = arith.constant 0 : i32
    return %c0_i32, %c0_i32_0 : i32, i32
  }
  func.func @transform_3(%arg0: i32) -> (i32, i32, i32) {
    %c0_i32 = arith.constant 0 : i32
    %c0_i32_0 = arith.constant 0 : i32
    %c0_i32_1 = arith.constant 0 : i32
    return %arg0, %c0_i32, %c0_i32_0 : i32, i32, i32
  }
}

</mosaic_0001>

<llo_original>
// kernel: tpu_custom_call.1
$region0: #{tpu_custom_call.1}
  #allocation0 [shape = 'u32[]', space=smem, size = 0x4, offset = 0x4, fixed_abs, tag = 'smem constant byte address 0x4 - core index']
  #allocation1 [shape = 'u32[144,128]{1,0:T(1,128)}', space=vmem, size = 0x12000, scoped, tag = 'internal scratch']
  %s0 = inlined_call_operand.hbm [shape: f32[2,4,256], index: 0, kind: input, shape index: {}]
  %s1 = inlined_call_operand.vmem [shape: f32[3,4], index: 1, kind: input, shape index: {}]
  %s2 = inlined_call_operand.vmem [shape: f32[3,1], index: 2, kind: input, shape index: {}]
  %s3 = inlined_call_operand.vmem [shape: f32[2,3,256], index: 3, kind: output, shape index: {}]
  %s4 = sld [smem:[#allocation0]]
  $region26: #{tpu_custom_call.1} parent=0
    _
  %s6 = ssub.s32 1, %s4
  %s7 = scalar_select 0, %s6, %s4
  $region1: #{tpu_custom_call.1} parent=0
    #allocation2 [shape = 'u8[8192]{0}', space=vmem, size = 0x2000, scoped, tag = 'input window, operand 0, single buffered']
    #allocation3 [shape = 's32[1]{0}', space=sflag, size = 0x4, scoped, tag = 'scoped memory for tpu_custom_call.1']
    %8 = vsyncpa [#allocation3], 0
    // Predicated region
    $region2: #{tpu_custom_call.1} parent=1 // pred_check
      _
    $region3: #{tpu_custom_call.1} parent=1 // pred_check_branch
      %10 = sbr.rel (0) target = $region5
    $region4: #{tpu_custom_call.1} parent=1 // pred_region
      %s12 = ssub.s32 256, 256
      %13 = vsyncadd [#allocation3], %s12
      %s14 = sshll.u32 [#allocation2], 4
      %s15 = int_to_ptr.vmem [resolvable:$true] %s14
      %20 = dma.hbm_to_vmem [thread:$0]  %s0, 256, %s15, [#allocation3], 128, 128, 8
    $region5: #{tpu_custom_call.1} parent=1 // pred_fallthru
      _
    // Predicated region
    $region6: #{tpu_custom_call.1} parent=1 // pred_check
      _
    $region7: #{tpu_custom_call.1} parent=1 // pred_check_branch
      %22 = sbr.rel (0) target = $region9
    $region8: #{tpu_custom_call.1} parent=1 // pred_region
      _
    $region9: #{tpu_custom_call.1} parent=1 // pred_fallthru
      _
    // Predicated region
    $region10: #{tpu_custom_call.1} parent=1 // pred_check
      _
    $region11: #{tpu_custom_call.1} parent=1 // pred_check_branch
      %24 = sbr.rel (0) target = $region13
    $region12: #{tpu_custom_call.1} parent=1 // pred_region
      _
    $region13: #{tpu_custom_call.1} parent=1 // pred_fallthru
      _
    // Predicated region
    $region14: #{tpu_custom_call.1} parent=1 // pred_check
      _
    $region15: #{tpu_custom_call.1} parent=1 // pred_check_branch
      %26 = sbr.rel (0) target = $region17
    $region16: #{tpu_custom_call.1} parent=1 // pred_region
      %27 = dma.done [#allocation3], 256
    $region17: #{tpu_custom_call.1} parent=1 // pred_fallthru
      _
    %v28 = vld [vmem:[%s1] sm:$0x7]
    %v29 = vld [vmem:[%s2] sm:$0x7]
    %v30 = vld [vmem:[#allocation2] sm:$0xff]
    %32 = vset.pattern.permute.xlu0 0
    %33 = vperm.xlu0 %32, %v29
    %v34 = vpop.permute.xlu0 %33
    %v37 = vcombine.high %v30, %v30
    %vm38 = vcmask 31744
    %v40 = vsel %vm38, %v28, 0
    %vm42 = vcmask 1043456
    %v43 = vsel %vm42, %v30, 0
    %v45 = vsel %vm42, %v37, 0
    %47 = vmatprep.subr.mxu0 0.0
    %48 = vmatpush1.msra.mxu0 0.0
    %49 = vmatprep.subr.mxu0 0.0
    %50 = vmatpush1.msra.mxu0 0.0
    %51 = vmatprep.subr.mxu0 0.0
    %52 = vmatpush1.msra.mxu0 0.0
    %53 = vmatprep.subr.mxu0 0.0
    %54 = vmatpush1.msra.mxu0 0.0
    %55 = vmatprep.subr.mxu0 0.0
    %56 = vmatpush1.msra.mxu0 0.0
    %57 = vmatprep.subr.mxu0 0.0
    %58 = vmatpush1.msra.mxu0 0.0
    %59 = vmatprep.subr.mxu0 0.0
    %60 = vmatpush1.msra.mxu0 0.0
    %61 = vmatprep.subr.mxu0 0.0
    %62 = vmatpush1.msra.mxu0 0.0
    %63 = vmatprep.subr.mxu0 0.0
    %64 = vmatpush1.msra.mxu0 0.0
    %65 = vmatprep.subr.mxu0 0.0
    %66 = vmatpush1.msra.mxu0 0.0
    %67 = vmatprep.subr.mxu0 0.0
    %68 = vmatpush1.msra.mxu0 0.0
    %69 = vmatprep.subr.mxu0 0.0
    %70 = vmatpush1.msra.mxu0 0.0
    %71 = vmatprep.subr.mxu0 0.0
    %72 = vmatpush1.msra.mxu0 0.0
    %73 = vmatprep.subr.mxu0 0.0
    %74 = vmatpush1.msra.mxu0 0.0
    %75 = vmatprep.subr.mxu0 0.0
    %76 = vmatpush1.msra.mxu0 0.0
    %77 = vmatprep.subr.mxu0 %v45
    %78 = vmatpush1.msra.mxu0 %v43
    %79 = vmatprep.subr.mxu0 0.0
    %80 = vmatpush2.msra.mxu0 0.0
    %81 = vmatprep.subr.mxu0 0.0
    %82 = vmatpush2.msra.mxu0 0.0
    %83 = vmatprep.subr.mxu0 0.0
    %84 = vmatpush2.msra.mxu0 0.0
    %85 = vmatprep.subr.mxu0 0.0
    %86 = vmatpush2.msra.mxu0 0.0
    %87 = vmatprep.subr.mxu0 0.0
    %88 = vmatpush2.msra.mxu0 0.0
    %89 = vmatprep.subr.mxu0 0.0
    %90 = vmatpush2.msra.mxu0 0.0
    %91 = vmatprep.subr.mxu0 0.0
    %92 = vmatpush2.msra.mxu0 0.0
    %93 = vmatprep.subr.mxu0 0.0
    %94 = vmatpush2.msra.mxu0 0.0
    %95 = vmatprep.subr.mxu0 0.0
    %96 = vmatpush2.msra.mxu0 0.0
    %97 = vmatprep.subr.mxu0 0.0
    %98 = vmatpush2.msra.mxu0 0.0
    %99 = vmatprep.subr.mxu0 0.0
    %100 = vmatpush2.msra.mxu0 0.0
    %101 = vmatprep.subr.mxu0 0.0
    %102 = vmatpush2.msra.mxu0 0.0
    %103 = vmatprep.subr.mxu0 0.0
    %104 = vmatpush2.msra.mxu0 0.0
    %105 = vmatprep.subr.mxu0 0.0
    %106 = vmatpush2.msra.mxu0 0.0
    %107 = vmatprep.subr.mxu0 0.0
    %108 = vmatpush2.msra.mxu0 0.0
    %109 = vmatprep.subr.mxu0 0.0
    %110 = vmatpush2.msra.mxu0 0.0
    %111 = vmatprep.mubr.f32.mxu0 0.0
    %112 = vmatmul.mubr.f32.gmra.mxu0 %v40
    %v113 = vpop.f32.mrf.mxu0
    %v114 = vadd.f32 %v34, %v113
    %v115 = vpop.f32.mrf.mxu0
    %v116 = vadd.f32 %v34, %v115
    %117 = vdwg.mxu0
    %v120 = vcombine.low %v114, %v116
    %122 = vst [vmem:[%s3] sm:$0x77] %v120
    %s123 = scalar_lea.vmem [#allocation2], 8
    %v124 = vld [vmem:[%s123] sm:$0xff]
    %v126 = vcombine.high %v124, %v124
    %v127 = vsel %vm42, %v124, 0
    %v129 = vsel %vm42, %v126, 0
    %131 = vmatprep.subr.mxu0 0.0
    %132 = vmatpush1.msra.mxu0 0.0
    %133 = vmatprep.subr.mxu0 0.0
    %134 = vmatpush1.msra.mxu0 0.0
    %135 = vmatprep.subr.mxu0 0.0
    %136 = vmatpush1.msra.mxu0 0.0
    %137 = vmatprep.subr.mxu0 0.0
    %138 = vmatpush1.msra.mxu0 0.0
    %139 = vmatprep.subr.mxu0 0.0
    %140 = vmatpush1.msra.mxu0 0.0
    %141 = vmatprep.subr.mxu0 0.0
    %142 = vmatpush1.msra.mxu0 0.0
    %143 = vmatprep.subr.mxu0 0.0
    %144 = vmatpush1.msra.mxu0 0.0
    %145 = vmatprep.subr.mxu0 0.0
    %146 = vmatpush1.msra.mxu0 0.0
    %147 = vmatprep.subr.mxu0 0.0
    %148 = vmatpush1.msra.mxu0 0.0
    %149 = vmatprep.subr.mxu0 0.0
    %150 = vmatpush1.msra.mxu0 0.0
    %151 = vmatprep.subr.mxu0 0.0
    %152 = vmatpush1.msra.mxu0 0.0
    %153 = vmatprep.subr.mxu0 0.0
    %154 = vmatpush1.msra.mxu0 0.0
    %155 = vmatprep.subr.mxu0 0.0
    %156 = vmatpush1.msra.mxu0 0.0
    %157 = vmatprep.subr.mxu0 0.0
    %158 = vmatpush1.msra.mxu0 0.0
    %159 = vmatprep.subr.mxu0 0.0
    %160 = vmatpush1.msra.mxu0 0.0
    %161 = vmatprep.subr.mxu0 %v129
    %162 = vmatpush1.msra.mxu0 %v127
    %163 = vmatprep.subr.mxu0 0.0
    %164 = vmatpush2.msra.mxu0 0.0
    %165 = vmatprep.subr.mxu0 0.0
    %166 = vmatpush2.msra.mxu0 0.0
    %167 = vmatprep.subr.mxu0 0.0
    %168 = vmatpush2.msra.mxu0 0.0
    %169 = vmatprep.subr.mxu0 0.0
    %170 = vmatpush2.msra.mxu0 0.0
    %171 = vmatprep.subr.mxu0 0.0
    %172 = vmatpush2.msra.mxu0 0.0
    %173 = vmatprep.subr.mxu0 0.0
    %174 = vmatpush2.msra.mxu0 0.0
    %175 = vmatprep.subr.mxu0 0.0
    %176 = vmatpush2.msra.mxu0 0.0
    %177 = vmatprep.subr.mxu0 0.0
    %178 = vmatpush2.msra.mxu0 0.0
    %179 = vmatprep.subr.mxu0 0.0
    %180 = vmatpush2.msra.mxu0 0.0
    %181 = vmatprep.subr.mxu0 0.0
    %182 = vmatpush2.msra.mxu0 0.0
    %183 = vmatprep.subr.mxu0 0.0
    %184 = vmatpush2.msra.mxu0 0.0
    %185 = vmatprep.subr.mxu0 0.0
    %186 = vmatpush2.msra.mxu0 0.0
    %187 = vmatprep.subr.mxu0 0.0
    %188 = vmatpush2.msra.mxu0 0.0
    %189 = vmatprep.subr.mxu0 0.0
    %190 = vmatpush2.msra.mxu0 0.0
    %191 = vmatprep.subr.mxu0 0.0
    %192 = vmatpush2.msra.mxu0 0.0
    %193 = vmatprep.subr.mxu0 0.0
    %194 = vmatpush2.msra.mxu0 0.0
    %195 = vmatprep.mubr.f32.mxu0 0.0
    %196 = vmatmul.mubr.f32.gmra.mxu0 %v40
    %v197 = vpop.f32.mrf.mxu0
    %v198 = vadd.f32 %v34, %v197
    %v199 = vpop.f32.mrf.mxu0
    %v200 = vadd.f32 %v34, %v199
    %201 = vdwg.mxu0
    %v204 = vcombine.low %v198, %v200
    %s206 = scalar_lea.vmem %s3, 8
    %207 = vst [vmem:[%s206] sm:$0x77] %v204
    // Predicated region
    $region18: #{tpu_custom_call.1} parent=1 // pred_check
      _
    $region19: #{tpu_custom_call.1} parent=1 // pred_check_branch
      %209 = sbr.rel (0) target = $region21
    $region20: #{tpu_custom_call.1} parent=1 // pred_region
      _
    $region21: #{tpu_custom_call.1} parent=1 // pred_fallthru
      _
    // Predicated region
    $region22: #{tpu_custom_call.1} parent=1 // pred_check
      _
    $region23: #{tpu_custom_call.1} parent=1 // pred_check_branch
      %211 = sbr.rel (0) target = $region25
    $region24: #{tpu_custom_call.1} parent=1 // pred_region
      _
    $region25: #{tpu_custom_call.1} parent=1 // pred_fallthru
      _
    %212 = vsyncpa [#allocation3], 1

</llo_original>
